<compile_context>
chip_gen: v7x
topology: tpu7x:2x2x1
jax: 0.10.0
libtpu: 0.0.40
codegen_flags: <defaults>
</compile_context>

<pallas_src>
import functools

import jax
import jax.numpy as jnp
from jax.experimental import pallas as pl
from jax.experimental.pallas import tpu as pltpu


def _fused_value_extraction_kernel(
    x_ref,      # (B_blk*C, H)  mxu_dtype, batch-major rows (row = b*C + c)
    w1_ref,     # (H, H)        mxu_dtype
    b1_ref,     # (1, H)        f32
    w2_ref,     # (H, H4)       mxu_dtype
    b2_ref,     # (1, H4)       f32
    w3_ref,     # (C*H4, H)     mxu_dtype
    b3_ref,     # (1, H)        f32
    w4_ref,     # (1, H)        f32   (Linear(H,1) weight as a lane row)
    b4_ref,     # (1, 1)        f32   in SMEM
    o_ref,      # (B_blk, 1)    f32
    *scratch,   # v_scr (B_blk*C, H4) [, v2_scr (B_blk, C*H4)] in mxu_dtype
    n_cluster, mxu_dtype, consolidate_w3):
    f32 = jnp.float32
    h_dim = w1_ref.shape[0]
    h4 = w2_ref.shape[1]
    b_blk = o_ref.shape[0]

    # ---- MLP1, fused over all batch*cluster rows: exactly two MXU passes ----
    h = jnp.dot(x_ref[...], w1_ref[...], preferred_element_type=f32) + b1_ref[...]
    h = jnp.maximum(h, 0.0)
    v = jnp.dot(h.astype(mxu_dtype), w2_ref[...],
                preferred_element_type=f32) + b2_ref[...]
    v = jnp.maximum(v, 0.0)                               # (B_blk*C, H4), batch-major

    v_scr = scratch[0]
    v_scr[...] = v.astype(mxu_dtype)

    # ---- my_view([0,-1]) + Linear(C*H4, H) ----
    # Batch-major rows mean cluster c's rows for every batch element are the
    # strided set {b*C + c}; pl.ds(c, B_blk, stride=C) gathers them from VMEM.
    if consolidate_w3:
        # Build the flattened (B_blk, C*H4) slab once, then one deep-K MXU pass.
        v2_scr = scratch[1]
        for c in range(n_cluster):                        # data movement only (no
            v2_scr[:, c * h4:(c + 1) * h4] = (            #  carried values -> no
                v_scr[pl.ds(c, b_blk, stride=n_cluster), :])  # live-range growth)
        pre = jnp.dot(v2_scr[...], w3_ref[...], preferred_element_type=f32)
    else:
        # Small C*H4: per-cluster accumulation (identical math, f32 accumulate).
        pre = jnp.zeros((b_blk, h_dim), f32)
        for c in range(n_cluster):
            vc = v_scr[pl.ds(c, b_blk, stride=n_cluster), :]        # (B_blk, H4)
            pre = pre + jnp.dot(vc, w3_ref[c * h4:(c + 1) * h4, :],
                                preferred_element_type=f32)

    h2 = jnp.maximum(pre + b3_ref[...], 0.0)              # (B_blk, H)

    # Final Linear(H, 1): VPU lane reduction (avoids an N=1 MXU pass that would
    # waste nearly all output lanes plus an MXU drain).
    out = jnp.sum(h2 * w4_ref[...], axis=-1, keepdims=True) + b4_ref[0, 0]
    o_ref[...] = out.astype(o_ref.dtype)


def _mxu_dtype_for(hidden_dim, use_bf16):
    """bf16 MXU operands only pay off when H is large (v6e/v7x 2x rate, half DMA);
    at small H the matmuls occupy one MXU pass either way and the casts are pure
    VALU overhead (v5e has no bf16 VPU) -- keep f32 there."""
    if use_bf16 is None:
        use_bf16 = hidden_dim >= 128
    return jnp.bfloat16 if use_bf16 else jnp.float32


def _pick_batch_block(batch):
    """Batch block size.  Whole batch when small / not sublane-aligned; otherwise
    a multiple-of-8 divisor yielding >= 2 grid blocks so v7x's 2 TensorCores can
    shard the 'parallel' batch axis, which also caps the per-step VMEM footprint."""
    if batch <= 8 or batch % 8 != 0:
        return batch
    for cand in (256, 128, 64, 32, 16, 8):
        if batch % cand == 0 and batch // cand >= 2:
            return cand
    return batch


def init_params(key, n_cluster, hidden_dim):
    """Deterministic PyTorch-Linear-style init: U(-1/sqrt(fan_in), 1/sqrt(fan_in))."""
    h = hidden_dim
    h4 = hidden_dim // 4
    shapes = [
        ("w1", (h, h)), ("b1", (1, h)),
        ("w2", (h, h4)), ("b2", (1, h4)),
        ("w3", (n_cluster * h4, h)), ("b3", (1, h)),
        ("w4", (h, 1)), ("b4", (1, 1)),
    ]
    fan_ins = {"w1": h, "b1": h, "w2": h, "b2": h,
               "w3": n_cluster * h4, "b3": n_cluster * h4, "w4": h, "b4": h}
    params = {}
    keys = jax.random.split(key, len(shapes))
    for k_i, (name, shape) in zip(keys, shapes):
        bound = 1.0 / (fan_ins[name] ** 0.5)
        params[name] = jax.random.uniform(
            k_i, shape, dtype=jnp.float32, minval=-bound, maxval=bound)
    return params


def value_extraction_forward(cluster_enc, params, *, use_bf16=None):
    """cluster_enc: (B, C, H) float32 -> (B, 1) float32."""
    B, C, H = cluster_enc.shape
    H4 = params["w2"].shape[1]
    assert params["w3"].shape == (C * H4, H)
    f32 = jnp.float32
    mxu_dtype = _mxu_dtype_for(H, use_bf16)

    # Free (view-only) batch-major flatten -- NO transpose / extra HBM pass.
    # x is pre-cast once here so the kernel does no input casts and the largest
    # HBM->VMEM DMA is halved when bf16 is in use.
    x_2d = cluster_enc.reshape(B * C, H).astype(mxu_dtype)
    w1 = params["w1"].astype(mxu_dtype)
    w2 = params["w2"].astype(mxu_dtype)
    w3 = params["w3"].astype(mxu_dtype)                   # (C*H4, H), kept 2D
    b1 = params["b1"].reshape(1, H).astype(f32)
    b2 = params["b2"].reshape(1, H4).astype(f32)
    b3 = params["b3"].reshape(1, H).astype(f32)
    w4_row = params["w4"].reshape(1, H).astype(f32)
    b4 = params["b4"].reshape(1, 1).astype(f32)

    b_blk = _pick_batch_block(B)
    n_blocks = B // b_blk
    consolidate_w3 = (C * H4) >= 128

    kernel = functools.partial(
        _fused_value_extraction_kernel,
        n_cluster=C, mxu_dtype=mxu_dtype, consolidate_w3=consolidate_w3)

    def pinned(shape):   # weights/biases: same block every grid step (no re-DMA)
        return pl.BlockSpec(shape, lambda i: (0, 0))

    in_specs = [
        pl.BlockSpec((b_blk * C, H), lambda i: (i, 0)),   # x, batch-blocked
        pinned((H, H)),        # w1
        pinned((1, H)),        # b1
        pinned((H, H4)),       # w2
        pinned((1, H4)),       # b2
        pinned((C * H4, H)),   # w3
        pinned((1, H)),        # b3
        pinned((1, H)),        # w4 row
        pl.BlockSpec(memory_space=pltpu.MemorySpace.SMEM),  # b4 scalar
    ]
    out_specs = pl.BlockSpec((b_blk, 1), lambda i: (i, 0))

    scratch_shapes = [pltpu.VMEM((b_blk * C, H4), mxu_dtype)]
    if consolidate_w3:
        scratch_shapes.append(pltpu.VMEM((b_blk, C * H4), mxu_dtype))

    args = (x_2d, w1, b1, w2, b2, w3, b3, w4_row, b4)
    flops = (2 * B * C * H * H          # MLP1 Linear(H, H)
             + 2 * B * C * H * H4       # MLP1 Linear(H, H//4)
             + 2 * B * C * H4 * H       # MLP2 Linear(C*H//4, H)
             + 2 * B * H)               # MLP2 Linear(H, 1) as a reduction
    bytes_accessed = sum(int(a.size) * a.dtype.itemsize for a in args) + B * 4

    # Resident-VMEM estimate (double-buffered x/out blocks + pinned weights +
    # scratch); only raise the scoped limit when needed, capped below v7x's
    # 64 MiB physical VMEM.
    it = jnp.dtype(mxu_dtype).itemsize
    resident = (2 * b_blk * C * H * it
                + (H * H + H * H4 + C * H4 * H) * it
                + (3 * H + H4) * 4
                + b_blk * C * H4 * it
                + (b_blk * C * H4 * it if consolidate_w3 else 0)
                + 2 * b_blk * 4)
    cp_kwargs = dict(dimension_semantics=("parallel",))
    if resident > 12 * 2**20:
        cp_kwargs["vmem_limit_bytes"] = int(min(max(2 * resident, 16 * 2**20),
                                                48 * 2**20))

    return pl.pallas_call(
        kernel,
        out_shape=jax.ShapeDtypeStruct((B, 1), f32),
        grid=(n_blocks,),
        in_specs=in_specs,
        out_specs=out_specs,
        scratch_shapes=scratch_shapes,
        compiler_params=pltpu.CompilerParams(**cp_kwargs),
        cost_estimate=pl.CostEstimate(
            flops=flops, transcendentals=0, bytes_accessed=bytes_accessed),
    )(*args)


def _reference_forward(cluster_enc, params, *, mxu_dtype=jnp.float32):
    """Pure-jnp reference; mxu_dtype mirrors the kernel's MXU operand cast."""
    B, C, H = cluster_enc.shape
    f32 = jnp.float32
    cast = lambda a: a.astype(mxu_dtype)
    x = cluster_enc.reshape(B * C, H)
    h = jnp.maximum(jnp.dot(cast(x), cast(params["w1"]),
                            preferred_element_type=f32) + params["b1"], 0.0)
    v = jnp.maximum(jnp.dot(cast(h), cast(params["w2"]),
                            preferred_element_type=f32) + params["b2"], 0.0)
    v = v.reshape(B, -1)                                  # my_view([0, -1])
    h2 = jnp.maximum(jnp.dot(cast(v), cast(params["w3"]),
                             preferred_element_type=f32) + params["b3"], 0.0)
    return jnp.dot(h2, params["w4"], preferred_element_type=f32) + params["b4"]


if __name__ == "__main__":
    # (batch, n_cluster, hidden_dim).  The three tiny cases exercise:
    #  1) per-cluster W3 accumulation, grid=(1,), f32 MXU operands
    #  2) batch-blocked grid (2 blocks), consolidated single-dot W3 path, f32
    #  3) bf16 MXU operands (H >= 128), consolidated path
    cases = [(2, 4, 32), (16, 8, 64), (2, 4, 128)]

    for (B, C, H) in cases:
        key = jax.random.PRNGKey(0)
        k_x, k_p = jax.random.split(key)
        cluster_enc = jax.random.normal(k_x, (B, C, H), dtype=jnp.float32)
        params = init_params(k_p, n_cluster=C, hidden_dim=H)

        out = jax.block_until_ready(value_extraction_forward(cluster_enc, params))
        assert out.shape == (B, 1), (out.shape, (B, 1))

        mxu_dtype = _mxu_dtype_for(H, None)
        # Check against a reference mirroring the kernel's MXU-operand policy.
        ref_policy = _reference_forward(cluster_enc, params, mxu_dtype=mxu_dtype)
        tol = 5e-3 if mxu_dtype == jnp.float32 else 1e-2
        assert jnp.allclose(out, ref_policy, atol=tol, rtol=tol), \
            ((B, C, H), out, ref_policy)
        # Loose sanity check against exact f32 PyTorch semantics.
        ref_f32 = _reference_forward(cluster_enc, params, mxu_dtype=jnp.float32)
        assert jnp.allclose(out, ref_f32, atol=5e-2, rtol=5e-2), \
            ((B, C, H), out, ref_f32)

    print("KERNEL_OK")
</pallas_src>

<mosaic_0001>
module attributes {stable_mosaic.version = 11 : i64} {
  func.func @_fused_value_extraction_kernel(%arg0: i32, %arg1: memref<8x32xf32, #tpu.memory_space<vmem>>, %arg2: memref<32x32xf32, #tpu.memory_space<vmem>>, %arg3: memref<1x32xf32, #tpu.memory_space<vmem>>, %arg4: memref<32x8xf32, #tpu.memory_space<vmem>>, %arg5: memref<1x8xf32, #tpu.memory_space<vmem>>, %arg6: memref<32x32xf32, #tpu.memory_space<vmem>>, %arg7: memref<1x32xf32, #tpu.memory_space<vmem>>, %arg8: memref<1x32xf32, #tpu.memory_space<vmem>>, %arg9: memref<1x1xf32, #tpu.memory_space<smem>>, %arg10: memref<2x1xf32, #tpu.memory_space<vmem>>, %arg11: memref<8x8xf32, #tpu.memory_space<vmem>>) attributes {dimension_semantics = [#tpu.dimension_semantics<parallel>], iteration_bounds = array<i64: 1>, scalar_prefetch = 0 : i64, scratch_operands = 1 : i64, tpu.core_type = #tpu.core_type<tc>, window_params = [{transform_indices = @transform_0, window_bounds = array<i64: 8, 32>}, {pipeline_mode = #tpu.pipeline_mode<synchronous>, transform_indices = @transform_1, window_bounds = array<i64: 32, 32>}, {pipeline_mode = #tpu.pipeline_mode<synchronous>, transform_indices = @transform_2, window_bounds = array<i64: 1, 32>}, {pipeline_mode = #tpu.pipeline_mode<synchronous>, transform_indices = @transform_3, window_bounds = array<i64: 32, 8>}, {pipeline_mode = #tpu.pipeline_mode<synchronous>, transform_indices = @transform_4, window_bounds = array<i64: 1, 8>}, {pipeline_mode = #tpu.pipeline_mode<synchronous>, transform_indices = @transform_5, window_bounds = array<i64: 32, 32>}, {pipeline_mode = #tpu.pipeline_mode<synchronous>, transform_indices = @transform_6, window_bounds = array<i64: 1, 32>}, {pipeline_mode = #tpu.pipeline_mode<synchronous>, transform_indices = @transform_7, window_bounds = array<i64: 1, 32>}, {transform_indices = @transform_8, window_bounds = array<i64: 1, 1>}, {transform_indices = @transform_9, window_bounds = array<i64: 2, 1>}]} {
    %c0 = arith.constant 0 : index
    %c0_0 = arith.constant 0 : index
    %0 = vector.load %arg1[%c0, %c0_0] : memref<8x32xf32, #tpu.memory_space<vmem>>, vector<8x32xf32>
    %c0_1 = arith.constant 0 : index
    %c0_2 = arith.constant 0 : index
    %1 = vector.load %arg2[%c0_1, %c0_2] : memref<32x32xf32, #tpu.memory_space<vmem>>, vector<32x32xf32>
    %cst = arith.constant dense<0.000000e+00> : vector<8x32xf32>
    %2 = tpu.matmul %0, %1, %cst {dimension_numbers = #tpu.dot_dimension_numbers<[1], [0], [0], [1], [0, 0, 1, 1], [], []>} : vector<8x32xf32>, vector<32x32xf32>, vector<8x32xf32> -> vector<8x32xf32>
    %c0_3 = arith.constant 0 : index
    %c0_4 = arith.constant 0 : index
    %3 = vector.load %arg3[%c0_3, %c0_4] : memref<1x32xf32, #tpu.memory_space<vmem>>, vector<1x32xf32>
    %4 = vector.broadcast %3 : vector<1x32xf32> to vector<8x32xf32>
    %5 = arith.addf %2, %4 : vector<8x32xf32>
    %cst_5 = arith.constant 0.000000e+00 : f32
    %6 = vector.broadcast %cst_5 : f32 to vector<8x32xf32>
    %7 = arith.maximumf %5, %6 : vector<8x32xf32>
    %c0_6 = arith.constant 0 : index
    %c0_7 = arith.constant 0 : index
    %8 = vector.load %arg4[%c0_6, %c0_7] : memref<32x8xf32, #tpu.memory_space<vmem>>, vector<32x8xf32>
    %cst_8 = arith.constant dense<0.000000e+00> : vector<8x8xf32>
    %9 = tpu.matmul %7, %8, %cst_8 {dimension_numbers = #tpu.dot_dimension_numbers<[1], [0], [0], [1], [0, 0, 1, 1], [], []>} : vector<8x32xf32>, vector<32x8xf32>, vector<8x8xf32> -> vector<8x8xf32>
    %c0_9 = arith.constant 0 : index
    %c0_10 = arith.constant 0 : index
    %10 = vector.load %arg5[%c0_9, %c0_10] : memref<1x8xf32, #tpu.memory_space<vmem>>, vector<1x8xf32>
    %11 = vector.broadcast %10 : vector<1x8xf32> to vector<8x8xf32>
    %12 = arith.addf %9, %11 : vector<8x8xf32>
    %cst_11 = arith.constant 0.000000e+00 : f32
    %13 = vector.broadcast %cst_11 : f32 to vector<8x8xf32>
    %14 = arith.maximumf %12, %13 : vector<8x8xf32>
    %c0_12 = arith.constant 0 : index
    %c0_13 = arith.constant 0 : index
    %15 = vector.load %arg11[%c0_12, %c0_13] : memref<8x8xf32, #tpu.memory_space<vmem>>, vector<8x8xf32>
    tpu.vector_store %arg11[%c0_12, %c0_13], %14 {strides = array<i32>} : memref<8x8xf32, #tpu.memory_space<vmem>>, vector<8x8xf32>,
    %cst_14 = arith.constant 0.000000e+00 : f32
    %16 = vector.broadcast %cst_14 : f32 to vector<2x32xf32>
    %c0_15 = arith.constant 0 : index
    %c0_16 = arith.constant 0 : index
    %17 = tpu.strided_load %arg11[%c0_15, %c0_16] {strides = array<i32: 4, 1>} : memref<8x8xf32, #tpu.memory_space<vmem>>, vector<2x8xf32>
    %c0_17 = arith.constant 0 : index
    %c0_18 = arith.constant 0 : index
    %18 = vector.load %arg6[%c0_17, %c0_18] : memref<32x32xf32, #tpu.memory_space<vmem>>, vector<8x32xf32>
    %cst_19 = arith.constant dense<0.000000e+00> : vector<2x32xf32>
    %19 = tpu.matmul %17, %18, %cst_19 {dimension_numbers = #tpu.dot_dimension_numbers<[1], [0], [0], [1], [0, 0, 1, 1], [], []>} : vector<2x8xf32>, vector<8x32xf32>, vector<2x32xf32> -> vector<2x32xf32>
    %20 = arith.addf %16, %19 : vector<2x32xf32>
    %c1 = arith.constant 1 : index
    %c0_20 = arith.constant 0 : index
    %21 = tpu.strided_load %arg11[%c1, %c0_20] {strides = array<i32: 4, 1>} : memref<8x8xf32, #tpu.memory_space<vmem>>, vector<2x8xf32>
    %c8 = arith.constant 8 : index
    %c0_21 = arith.constant 0 : index
    %22 = vector.load %arg6[%c8, %c0_21] : memref<32x32xf32, #tpu.memory_space<vmem>>, vector<8x32xf32>
    %cst_22 = arith.constant dense<0.000000e+00> : vector<2x32xf32>
    %23 = tpu.matmul %21, %22, %cst_22 {dimension_numbers = #tpu.dot_dimension_numbers<[1], [0], [0], [1], [0, 0, 1, 1], [], []>} : vector<2x8xf32>, vector<8x32xf32>, vector<2x32xf32> -> vector<2x32xf32>
    %24 = arith.addf %20, %23 : vector<2x32xf32>
    %c2 = arith.constant 2 : index
    %c0_23 = arith.constant 0 : index
    %25 = tpu.strided_load %arg11[%c2, %c0_23] {strides = array<i32: 4, 1>} : memref<8x8xf32, #tpu.memory_space<vmem>>, vector<2x8xf32>
    %c16 = arith.constant 16 : index
    %c0_24 = arith.constant 0 : index
    %26 = vector.load %arg6[%c16, %c0_24] : memref<32x32xf32, #tpu.memory_space<vmem>>, vector<8x32xf32>
    %cst_25 = arith.constant dense<0.000000e+00> : vector<2x32xf32>
    %27 = tpu.matmul %25, %26, %cst_25 {dimension_numbers = #tpu.dot_dimension_numbers<[1], [0], [0], [1], [0, 0, 1, 1], [], []>} : vector<2x8xf32>, vector<8x32xf32>, vector<2x32xf32> -> vector<2x32xf32>
    %28 = arith.addf %24, %27 : vector<2x32xf32>
    %c3 = arith.constant 3 : index
    %c0_26 = arith.constant 0 : index
    %29 = tpu.strided_load %arg11[%c3, %c0_26] {strides = array<i32: 4, 1>} : memref<8x8xf32, #tpu.memory_space<vmem>>, vector<2x8xf32>
    %c24 = arith.constant 24 : index
    %c0_27 = arith.constant 0 : index
    %30 = vector.load %arg6[%c24, %c0_27] : memref<32x32xf32, #tpu.memory_space<vmem>>, vector<8x32xf32>
    %cst_28 = arith.constant dense<0.000000e+00> : vector<2x32xf32>
    %31 = tpu.matmul %29, %30, %cst_28 {dimension_numbers = #tpu.dot_dimension_numbers<[1], [0], [0], [1], [0, 0, 1, 1], [], []>} : vector<2x8xf32>, vector<8x32xf32>, vector<2x32xf32> -> vector<2x32xf32>
    %32 = arith.addf %28, %31 : vector<2x32xf32>
    %c0_29 = arith.constant 0 : index
    %c0_30 = arith.constant 0 : index
    %33 = vector.load %arg7[%c0_29, %c0_30] : memref<1x32xf32, #tpu.memory_space<vmem>>, vector<1x32xf32>
    %34 = vector.broadcast %33 : vector<1x32xf32> to vector<2x32xf32>
    %35 = arith.addf %32, %34 : vector<2x32xf32>
    %cst_31 = arith.constant 0.000000e+00 : f32
    %36 = vector.broadcast %cst_31 : f32 to vector<2x32xf32>
    %37 = arith.maximumf %35, %36 : vector<2x32xf32>
    %c0_32 = arith.constant 0 : index
    %c0_33 = arith.constant 0 : index
    %38 = vector.load %arg8[%c0_32, %c0_33] : memref<1x32xf32, #tpu.memory_space<vmem>>, vector<1x32xf32>
    %39 = vector.broadcast %38 : vector<1x32xf32> to vector<2x32xf32>
    %40 = arith.mulf %37, %39 : vector<2x32xf32>
    %cst_34 = arith.constant dense<0.000000e+00> : vector<2xf32>
    %41 = vector.multi_reduction <add>, %40, %cst_34 [1] : vector<2x32xf32> to vector<2xf32>
    %42 = vector.shape_cast %41 : vector<2xf32> to vector<2x1xf32>
    %c0_35 = arith.constant 0 : index
    %c0_36 = arith.constant 0 : index
    %43 = memref.load %arg9[%c0_35, %c0_36] : memref<1x1xf32, #tpu.memory_space<smem>>
    %44 = vector.broadcast %43 : f32 to vector<2x1xf32>
    %45 = arith.addf %42, %44 : vector<2x1xf32>
    %c0_37 = arith.constant 0 : index
    %c0_38 = arith.constant 0 : index
    %46 = vector.load %arg10[%c0_37, %c0_38] : memref<2x1xf32, #tpu.memory_space<vmem>>, vector<2x1xf32>
    tpu.vector_store %arg10[%c0_37, %c0_38], %45 {strides = array<i32>} : memref<2x1xf32, #tpu.memory_space<vmem>>, vector<2x1xf32>,
    return
  }
  func.func @transform_0(%arg0: i32) -> (i32, i32) {
    %c0_i32 = arith.constant 0 : i32
    %c0_i32_0 = arith.constant 0 : i32
    return %arg0, %c0_i32 : i32, i32
  }
  func.func @transform_1(%arg0: i32) -> (i32, i32) {
    %c0_i32 = arith.constant 0 : i32
    %c0_i32_0 = arith.constant 0 : i32
    %c0_i32_1 = arith.constant 0 : i32
    return %c0_i32, %c0_i32_0 : i32, i32
  }
  func.func @transform_2(%arg0: i32) -> (i32, i32) {
    %c0_i32 = arith.constant 0 : i32
    %c0_i32_0 = arith.constant 0 : i32
    %c0_i32_1 = arith.constant 0 : i32
    return %c0_i32, %c0_i32_0 : i32, i32
  }
  func.func @transform_3(%arg0: i32) -> (i32, i32) {
    %c0_i32 = arith.constant 0 : i32
    %c0_i32_0 = arith.constant 0 : i32
    %c0_i32_1 = arith.constant 0 : i32
    return %c0_i32, %c0_i32_0 : i32, i32
  }
  func.func @transform_4(%arg0: i32) -> (i32, i32) {
    %c0_i32 = arith.constant 0 : i32
    %c0_i32_0 = arith.constant 0 : i32
    %c0_i32_1 = arith.constant 0 : i32
    return %c0_i32, %c0_i32_0 : i32, i32
  }
  func.func @transform_5(%arg0: i32) -> (i32, i32) {
    %c0_i32 = arith.constant 0 : i32
    %c0_i32_0 = arith.constant 0 : i32
    %c0_i32_1 = arith.constant 0 : i32
    return %c0_i32, %c0_i32_0 : i32, i32
  }
  func.func @transform_6(%arg0: i32) -> (i32, i32) {
    %c0_i32 = arith.constant 0 : i32
    %c0_i32_0 = arith.constant 0 : i32
    %c0_i32_1 = arith.constant 0 : i32
    return %c0_i32, %c0_i32_0 : i32, i32
  }
  func.func @transform_7(%arg0: i32) -> (i32, i32) {
    %c0_i32 = arith.constant 0 : i32
    %c0_i32_0 = arith.constant 0 : i32
    %c0_i32_1 = arith.constant 0 : i32
    return %c0_i32, %c0_i32_0 : i32, i32
  }
  func.func @transform_8(%arg0: i32) -> (i32, i32) {
    %c0_i32 = arith.constant 0 : i32
    %c0_i32_0 = arith.constant 0 : i32
    %c0_i32_1 = arith.constant 0 : i32
    return %c0_i32, %c0_i32_0 : i32, i32
  }
  func.func @transform_9(%arg0: i32) -> (i32, i32) {
    %c0_i32 = arith.constant 0 : i32
    %c0_i32_0 = arith.constant 0 : i32
    return %arg0, %c0_i32 : i32, i32
  }
}

</mosaic_0001>

<llo_original>
// kernel: tpu_custom_call.1
$region0: #{tpu_custom_call.1}
  #allocation0 [shape = 'u32[]', space=smem, size = 0x4, offset = 0x4, fixed_abs, tag = 'smem constant byte address 0x4 - core index']
  #allocation1 [shape = 'u32[144,128]{1,0:T(1,128)}', space=vmem, size = 0x12000, scoped, tag = 'internal scratch']
  #allocation2 [shape = 'f32[8,8]{1,0:T(8,128)}', space=vmem, size = 0x1000, scoped, tag = 'scratch operand']
  #allocation3 [shape = 'f32[1,1]{1,0:T(1,128)S(6)}', space=smem, size = 0x200, scoped, tag = 'scoped memory for tpu_custom_call.1']
  %s0 = inlined_call_operand.vmem [shape: f32[8,32], index: 0, kind: input, shape index: {}]
  %s1 = inlined_call_operand.vmem [shape: f32[32,32], index: 1, kind: input, shape index: {}]
  %s2 = inlined_call_operand.vmem [shape: f32[1,32], index: 2, kind: input, shape index: {}]
  %s3 = inlined_call_operand.vmem [shape: f32[32,8], index: 3, kind: input, shape index: {}]
  %s4 = inlined_call_operand.vmem [shape: f32[1,8], index: 4, kind: input, shape index: {}]
  %s5 = inlined_call_operand.hbm [shape: f32[32,32], index: 5, kind: input, shape index: {}]
  %s6 = inlined_call_operand.vmem [shape: f32[1,32], index: 6, kind: input, shape index: {}]
  %s7 = inlined_call_operand.vmem [shape: f32[1,32], index: 7, kind: input, shape index: {}]
  %s8 = inlined_call_operand.<no memory space> [shape: f32[1,1], index: 8, kind: input, shape index: {}]
  %s9 = inlined_call_operand.vmem [shape: f32[2,1], index: 9, kind: output, shape index: {}]
  %s10 = sld [smem:[#allocation0]]
  $region50: #{tpu_custom_call.1} parent=0
    _
  %s12 = ssub.s32 1, %s10
  %s13 = scalar_select 0, %s12, %s10
  %14 = sst [smem:[#allocation3]] %s8
  $region1: #{tpu_custom_call.1} parent=0
    #allocation4 [shape = 'u8[16384]{0}', space=vmem, size = 0x4000, scoped, tag = 'input window, operand 5, single buffered']
    #allocation5 [shape = 's32[1]{0}', space=sflag, size = 0x4, scoped, tag = 'scoped memory for tpu_custom_call.1']
    %15 = vsyncpa [#allocation5], 0
    // Predicated region
    $region2: #{tpu_custom_call.1} parent=1 // pred_check
      _
    $region3: #{tpu_custom_call.1} parent=1 // pred_check_branch
      %17 = sbr.rel (0) target = $region5
    $region4: #{tpu_custom_call.1} parent=1 // pred_region
      _
    $region5: #{tpu_custom_call.1} parent=1 // pred_fallthru
      _
    // Predicated region
    $region6: #{tpu_custom_call.1} parent=1 // pred_check
      _
    $region7: #{tpu_custom_call.1} parent=1 // pred_check_branch
      %19 = sbr.rel (0) target = $region9
    $region8: #{tpu_custom_call.1} parent=1 // pred_region
      _
    $region9: #{tpu_custom_call.1} parent=1 // pred_fallthru
      _
    // Predicated region
    $region10: #{tpu_custom_call.1} parent=1 // pred_check
      _
    $region11: #{tpu_custom_call.1} parent=1 // pred_check_branch
      %21 = sbr.rel (0) target = $region13
    $region12: #{tpu_custom_call.1} parent=1 // pred_region
      _
    $region13: #{tpu_custom_call.1} parent=1 // pred_fallthru
      _
    // Predicated region
    $region14: #{tpu_custom_call.1} parent=1 // pred_check
      _
    $region15: #{tpu_custom_call.1} parent=1 // pred_check_branch
      %23 = sbr.rel (0) target = $region17
    $region16: #{tpu_custom_call.1} parent=1 // pred_region
      _
    $region17: #{tpu_custom_call.1} parent=1 // pred_fallthru
      _
    // Predicated region
    $region18: #{tpu_custom_call.1} parent=1 // pred_check
      _
    $region19: #{tpu_custom_call.1} parent=1 // pred_check_branch
      %25 = sbr.rel (0) target = $region21
    $region20: #{tpu_custom_call.1} parent=1 // pred_region
      _
    $region21: #{tpu_custom_call.1} parent=1 // pred_fallthru
      _
    // Predicated region
    $region22: #{tpu_custom_call.1} parent=1 // pred_check
      _
    $region23: #{tpu_custom_call.1} parent=1 // pred_check_branch
      %27 = sbr.rel (0) target = $region25
    $region24: #{tpu_custom_call.1} parent=1 // pred_region
      %s29 = ssub.s32 512, 512
      %30 = vsyncadd [#allocation5], %s29
      %s31 = sshll.u32 [#allocation4], 4
      %s32 = int_to_ptr.vmem [resolvable:$true] %s31
      %37 = dma.hbm_to_vmem [thread:$0]  %s5, 512, %s32, [#allocation5], 128, 128, 8
    $region25: #{tpu_custom_call.1} parent=1 // pred_fallthru
      _
    // Predicated region
    $region26: #{tpu_custom_call.1} parent=1 // pred_check
      _
    $region27: #{tpu_custom_call.1} parent=1 // pred_check_branch
      %39 = sbr.rel (0) target = $region29
    $region28: #{tpu_custom_call.1} parent=1 // pred_region
      _
    $region29: #{tpu_custom_call.1} parent=1 // pred_fallthru
      _
    // Predicated region
    $region30: #{tpu_custom_call.1} parent=1 // pred_check
      _
    $region31: #{tpu_custom_call.1} parent=1 // pred_check_branch
      %41 = sbr.rel (0) target = $region33
    $region32: #{tpu_custom_call.1} parent=1 // pred_region
      _
    $region33: #{tpu_custom_call.1} parent=1 // pred_fallthru
      _
    // Predicated region
    $region34: #{tpu_custom_call.1} parent=1 // pred_check
      _
    $region35: #{tpu_custom_call.1} parent=1 // pred_check_branch
      %43 = sbr.rel (0) target = $region37
    $region36: #{tpu_custom_call.1} parent=1 // pred_region
      _
    $region37: #{tpu_custom_call.1} parent=1 // pred_fallthru
      _
    // Predicated region
    $region38: #{tpu_custom_call.1} parent=1 // pred_check
      _
    $region39: #{tpu_custom_call.1} parent=1 // pred_check_branch
      %45 = sbr.rel (0) target = $region41
    $region40: #{tpu_custom_call.1} parent=1 // pred_region
      %46 = dma.done [#allocation5], 512
    $region41: #{tpu_custom_call.1} parent=1 // pred_fallthru
      _
    %v47 = vld [vmem:[%s0] sm:$0xff]
    %v48 = vld [vmem:[%s1] sm:$0xff]
    %v49 = vld [vmem:[%s1 + $0x8] sm:$0xff]
    %v50 = vld [vmem:[%s1 + $0x10] sm:$0xff]
    %v51 = vld [vmem:[%s1 + $0x18] sm:$0xff]
    %v52 = vld [vmem:[%s2] sm:$0x1]
    %v54 = vlaneseq
    %v55 = vshrl.u32 %v54, 7
    %v56 = vsub.s32 0, %v55
    %v57 = vrot.slane %v52, %v56
    %vm59 = vcmask 261120
    %v61 = vsel %vm59, %v47, 0
    %63 = vmatprep.subr.mxu0 0.0
    %64 = vmatpush1.msra.mxu0 %v48
    %65 = vmatprep.subr.mxu0 0.0
    %66 = vmatpush1.msra.mxu0 %v49
    %67 = vmatprep.subr.mxu0 0.0
    %68 = vmatpush1.msra.mxu0 %v50
    %69 = vmatprep.subr.mxu0 0.0
    %70 = vmatpush1.msra.mxu0 %v51
    %71 = vmatprep.subr.mxu0 0.0
    %72 = vmatpush1.msra.mxu0 0.0
    %73 = vmatprep.subr.mxu0 0.0
    %74 = vmatpush1.msra.mxu0 0.0
    %75 = vmatprep.subr.mxu0 0.0
    %76 = vmatpush1.msra.mxu0 0.0
    %77 = vmatprep.subr.mxu0 0.0
    %78 = vmatpush1.msra.mxu0 0.0
    %79 = vmatprep.subr.mxu0 0.0
    %80 = vmatpush1.msra.mxu0 0.0
    %81 = vmatprep.subr.mxu0 0.0
    %82 = vmatpush1.msra.mxu0 0.0
    %83 = vmatprep.subr.mxu0 0.0
    %84 = vmatpush1.msra.mxu0 0.0
    %85 = vmatprep.subr.mxu0 0.0
    %86 = vmatpush1.msra.mxu0 0.0
    %87 = vmatprep.subr.mxu0 0.0
    %88 = vmatpush1.msra.mxu0 0.0
    %89 = vmatprep.subr.mxu0 0.0
    %90 = vmatpush1.msra.mxu0 0.0
    %91 = vmatprep.subr.mxu0 0.0
    %92 = vmatpush1.msra.mxu0 0.0
    %93 = vmatprep.subr.mxu0 0.0
    %94 = vmatpush1.msra.mxu0 0.0
    %95 = vmatprep.subr.mxu0 0.0
    %96 = vmatpush1.msra.mxu0 0.0
    %97 = vmatprep.subr.mxu0 0.0
    %98 = vmatpush1.msra.mxu0 0.0
    %99 = vmatprep.subr.mxu0 0.0
    %100 = vmatpush1.msra.mxu0 0.0
    %101 = vmatprep.subr.mxu0 0.0
    %102 = vmatpush1.msra.mxu0 0.0
    %103 = vmatprep.subr.mxu0 0.0
    %104 = vmatpush1.msra.mxu0 0.0
    %105 = vmatprep.subr.mxu0 0.0
    %106 = vmatpush1.msra.mxu0 0.0
    %107 = vmatprep.subr.mxu0 0.0
    %108 = vmatpush1.msra.mxu0 0.0
    %109 = vmatprep.subr.mxu0 0.0
    %110 = vmatpush1.msra.mxu0 0.0
    %111 = vmatprep.subr.mxu0 0.0
    %112 = vmatpush1.msra.mxu0 0.0
    %113 = vmatprep.subr.mxu0 0.0
    %114 = vmatpush1.msra.mxu0 0.0
    %115 = vmatprep.subr.mxu0 0.0
    %116 = vmatpush1.msra.mxu0 0.0
    %117 = vmatprep.subr.mxu0 0.0
    %118 = vmatpush1.msra.mxu0 0.0
    %119 = vmatprep.subr.mxu0 0.0
    %120 = vmatpush1.msra.mxu0 0.0
    %121 = vmatprep.subr.mxu0 0.0
    %122 = vmatpush1.msra.mxu0 0.0
    %123 = vmatprep.subr.mxu0 0.0
    %124 = vmatpush1.msra.mxu0 0.0
    %125 = vmatprep.subr.mxu0 0.0
    %126 = vmatpush1.msra.mxu0 0.0
    %127 = vmatprep.mubr.f32.mxu0 0.0
    %128 = vmatmul.mubr.f32.gmra.mrb[0].mxu0 %v61
    %v129 = vpop.f32.mrb[0].mxu0
    %v130 = vadd.f32 %v57, %v129
    %v131 = vpop.f32.mrb[0].mxu0
    %132 = vdwg.mxu0
    %v133 = vmax.f32 %v130, 0.0
    %v134 = vld [vmem:[%s3] sm:$0xff]
    %v135 = vld [vmem:[%s3 + $0x8] sm:$0xff]
    %v136 = vld [vmem:[%s3 + $0x10] sm:$0xff]
    %v137 = vld [vmem:[%s3 + $0x18] sm:$0xff]
    %v138 = vld [vmem:[%s4] sm:$0x1]
    %v140 = vlaneseq
    %v141 = vshrl.u32 %v140, 7
    %v142 = vsub.s32 0, %v141
    %v143 = vrot.slane %v138, %v142
    %v146 = vsel %vm59, %v133, 0
    %148 = vmatprep.subr.mxu0 0.0
    %149 = vmatpush1.msra.mxu0 %v134
    %150 = vmatprep.subr.mxu0 0.0
    %151 = vmatpush1.msra.mxu0 %v135
    %152 = vmatprep.subr.mxu0 0.0
    %153 = vmatpush1.msra.mxu0 %v136
    %154 = vmatprep.subr.mxu0 0.0
    %155 = vmatpush1.msra.mxu0 %v137
    %156 = vmatprep.subr.mxu0 0.0
    %157 = vmatpush1.msra.mxu0 0.0
    %158 = vmatprep.subr.mxu0 0.0
    %159 = vmatpush1.msra.mxu0 0.0
    %160 = vmatprep.subr.mxu0 0.0
    %161 = vmatpush1.msra.mxu0 0.0
    %162 = vmatprep.subr.mxu0 0.0
    %163 = vmatpush1.msra.mxu0 0.0
    %164 = vmatprep.subr.mxu0 0.0
    %165 = vmatpush1.msra.mxu0 0.0
    %166 = vmatprep.subr.mxu0 0.0
    %167 = vmatpush1.msra.mxu0 0.0
    %168 = vmatprep.subr.mxu0 0.0
    %169 = vmatpush1.msra.mxu0 0.0
    %170 = vmatprep.subr.mxu0 0.0
    %171 = vmatpush1.msra.mxu0 0.0
    %172 = vmatprep.subr.mxu0 0.0
    %173 = vmatpush1.msra.mxu0 0.0
    %174 = vmatprep.subr.mxu0 0.0
    %175 = vmatpush1.msra.mxu0 0.0
    %176 = vmatprep.subr.mxu0 0.0
    %177 = vmatpush1.msra.mxu0 0.0
    %178 = vmatprep.subr.mxu0 0.0
    %179 = vmatpush1.msra.mxu0 0.0
    %180 = vmatprep.subr.mxu0 0.0
    %181 = vmatpush1.msra.mxu0 0.0
    %182 = vmatprep.subr.mxu0 0.0
    %183 = vmatpush1.msra.mxu0 0.0
    %184 = vmatprep.subr.mxu0 0.0
    %185 = vmatpush1.msra.mxu0 0.0
    %186 = vmatprep.subr.mxu0 0.0
    %187 = vmatpush1.msra.mxu0 0.0
    %188 = vmatprep.subr.mxu0 0.0
    %189 = vmatpush1.msra.mxu0 0.0
    %190 = vmatprep.subr.mxu0 0.0
    %191 = vmatpush1.msra.mxu0 0.0
    %192 = vmatprep.subr.mxu0 0.0
    %193 = vmatpush1.msra.mxu0 0.0
    %194 = vmatprep.subr.mxu0 0.0
    %195 = vmatpush1.msra.mxu0 0.0
    %196 = vmatprep.subr.mxu0 0.0
    %197 = vmatpush1.msra.mxu0 0.0
    %198 = vmatprep.subr.mxu0 0.0
    %199 = vmatpush1.msra.mxu0 0.0
    %200 = vmatprep.subr.mxu0 0.0
    %201 = vmatpush1.msra.mxu0 0.0
    %202 = vmatprep.subr.mxu0 0.0
    %203 = vmatpush1.msra.mxu0 0.0
    %204 = vmatprep.subr.mxu0 0.0
    %205 = vmatpush1.msra.mxu0 0.0
    %206 = vmatprep.subr.mxu0 0.0
    %207 = vmatpush1.msra.mxu0 0.0
    %208 = vmatprep.subr.mxu0 0.0
    %209 = vmatpush1.msra.mxu0 0.0
    %210 = vmatprep.subr.mxu0 0.0
    %211 = vmatpush1.msra.mxu0 0.0
    %212 = vmatprep.mubr.f32.mxu0 0.0
    %213 = vmatmul.mubr.f32.gmra.mrb[0].mxu0 %v146
    %v214 = vpop.f32.mrb[0].mxu0
    %v215 = vadd.f32 %v143, %v214
    %v216 = vpop.f32.mrb[0].mxu0
    %217 = vdwg.mxu0
    %v218 = vmax.f32 %v215, 0.0
    %vm219 = vcmask 64512
    %220 = vst.msk [vmem:[#allocation2] sm:$0xff] %vm219, %v218
    %v221 = vld [vmem:[#allocation2] ss:$4 sm:$0x3]
    %v222 = vld [vmem:[#allocation4] sm:$0xff]
    %s223 = scalar_lea.vmem [#allocation2], 1
    %v224 = vld [vmem:[%s223] ss:$4 sm:$0x3]
    %v225 = vld [vmem:[#allocation4 + $0x8] sm:$0xff]
    %v227 = vsel %vm219, %v224, 0
    %229 = vmatprep.subr.mxu0 0.0
    %230 = vmatpush1.msra.mxu0 %v225
    %231 = vmatprep.subr.mxu0 0.0
    %232 = vmatpush1.msra.mxu0 0.0
    %233 = vmatprep.subr.mxu0 0.0
    %234 = vmatpush1.msra.mxu0 0.0
    %235 = vmatprep.subr.mxu0 0.0
    %236 = vmatpush1.msra.mxu0 0.0
    %237 = vmatprep.subr.mxu0 0.0
    %238 = vmatpush1.msra.mxu0 0.0
    %239 = vmatprep.subr.mxu0 0.0
    %240 = vmatpush1.msra.mxu0 0.0
    %241 = vmatprep.subr.mxu0 0.0
    %242 = vmatpush1.msra.mxu0 0.0
    %243 = vmatprep.subr.mxu0 0.0
    %244 = vmatpush1.msra.mxu0 0.0
    %245 = vmatprep.subr.mxu0 0.0
    %246 = vmatpush1.msra.mxu0 0.0
    %247 = vmatprep.subr.mxu0 0.0
    %248 = vmatpush1.msra.mxu0 0.0
    %249 = vmatprep.subr.mxu0 0.0
    %250 = vmatpush1.msra.mxu0 0.0
    %251 = vmatprep.subr.mxu0 0.0
    %252 = vmatpush1.msra.mxu0 0.0
    %253 = vmatprep.subr.mxu0 0.0
    %254 = vmatpush1.msra.mxu0 0.0
    %255 = vmatprep.subr.mxu0 0.0
    %256 = vmatpush1.msra.mxu0 0.0
    %257 = vmatprep.subr.mxu0 0.0
    %258 = vmatpush1.msra.mxu0 0.0
    %259 = vmatprep.subr.mxu0 0.0
    %260 = vmatpush1.msra.mxu0 0.0
    %261 = vmatprep.subr.mxu0 0.0
    %262 = vmatpush1.msra.mxu0 0.0
    %263 = vmatprep.subr.mxu0 0.0
    %264 = vmatpush1.msra.mxu0 0.0
    %265 = vmatprep.subr.mxu0 0.0
    %266 = vmatpush1.msra.mxu0 0.0
    %267 = vmatprep.subr.mxu0 0.0
    %268 = vmatpush1.msra.mxu0 0.0
    %269 = vmatprep.subr.mxu0 0.0
    %270 = vmatpush1.msra.mxu0 0.0
    %271 = vmatprep.subr.mxu0 0.0
    %272 = vmatpush1.msra.mxu0 0.0
    %273 = vmatprep.subr.mxu0 0.0
    %274 = vmatpush1.msra.mxu0 0.0
    %275 = vmatprep.subr.mxu0 0.0
    %276 = vmatpush1.msra.mxu0 0.0
    %277 = vmatprep.subr.mxu0 0.0
    %278 = vmatpush1.msra.mxu0 0.0
    %279 = vmatprep.subr.mxu0 0.0
    %280 = vmatpush1.msra.mxu0 0.0
    %281 = vmatprep.subr.mxu0 0.0
    %282 = vmatpush1.msra.mxu0 0.0
    %283 = vmatprep.subr.mxu0 0.0
    %284 = vmatpush1.msra.mxu0 0.0
    %285 = vmatprep.subr.mxu0 0.0
    %286 = vmatpush1.msra.mxu0 0.0
    %287 = vmatprep.subr.mxu0 0.0
    %288 = vmatpush1.msra.mxu0 0.0
    %289 = vmatprep.subr.mxu0 0.0
    %290 = vmatpush1.msra.mxu0 0.0
    %291 = vmatprep.subr.mxu0 0.0
    %292 = vmatpush1.msra.mxu0 0.0
    %293 = vmatprep.mubr.f32.mxu0 0.0
    %294 = vmatmul.mubr.f32.gmra.mrb[0].mxu0 %v227
    %v295 = vpop.f32.mrb[0].mxu0
    %v296 = vadd.f32 0.0, %v295
    %v297 = vpop.f32.mrb[0].mxu0
    %298 = vdwg.mxu0
    %v300 = vsel %vm219, %v221, 0
    %302 = vmatprep.subr.mxu0 0.0
    %303 = vmatpush1.msra.mxu0 %v222
    %304 = vmatprep.subr.mxu0 0.0
    %305 = vmatpush1.msra.mxu0 0.0
    %306 = vmatprep.subr.mxu0 0.0
    %307 = vmatpush1.msra.mxu0 0.0
    %308 = vmatprep.subr.mxu0 0.0
    %309 = vmatpush1.msra.mxu0 0.0
    %310 = vmatprep.subr.mxu0 0.0
    %311 = vmatpush1.msra.mxu0 0.0
    %312 = vmatprep.subr.mxu0 0.0
    %313 = vmatpush1.msra.mxu0 0.0
    %314 = vmatprep.subr.mxu0 0.0
    %315 = vmatpush1.msra.mxu0 0.0
    %316 = vmatprep.subr.mxu0 0.0
    %317 = vmatpush1.msra.mxu0 0.0
    %318 = vmatprep.subr.mxu0 0.0
    %319 = vmatpush1.msra.mxu0 0.0
    %320 = vmatprep.subr.mxu0 0.0
    %321 = vmatpush1.msra.mxu0 0.0
    %322 = vmatprep.subr.mxu0 0.0
    %323 = vmatpush1.msra.mxu0 0.0
    %324 = vmatprep.subr.mxu0 0.0
    %325 = vmatpush1.msra.mxu0 0.0
    %326 = vmatprep.subr.mxu0 0.0
    %327 = vmatpush1.msra.mxu0 0.0
    %328 = vmatprep.subr.mxu0 0.0
    %329 = vmatpush1.msra.mxu0 0.0
    %330 = vmatprep.subr.mxu0 0.0
    %331 = vmatpush1.msra.mxu0 0.0
    %332 = vmatprep.subr.mxu0 0.0
    %333 = vmatpush1.msra.mxu0 0.0
    %334 = vmatprep.subr.mxu0 0.0
    %335 = vmatpush1.msra.mxu0 0.0
    %336 = vmatprep.subr.mxu0 0.0
    %337 = vmatpush1.msra.mxu0 0.0
    %338 = vmatprep.subr.mxu0 0.0
    %339 = vmatpush1.msra.mxu0 0.0
    %340 = vmatprep.subr.mxu0 0.0
    %341 = vmatpush1.msra.mxu0 0.0
    %342 = vmatprep.subr.mxu0 0.0
    %343 = vmatpush1.msra.mxu0 0.0
    %344 = vmatprep.subr.mxu0 0.0
    %345 = vmatpush1.msra.mxu0 0.0
    %346 = vmatprep.subr.mxu0 0.0
    %347 = vmatpush1.msra.mxu0 0.0
    %348 = vmatprep.subr.mxu0 0.0
    %349 = vmatpush1.msra.mxu0 0.0
    %350 = vmatprep.subr.mxu0 0.0
    %351 = vmatpush1.msra.mxu0 0.0
    %352 = vmatprep.subr.mxu0 0.0
    %353 = vmatpush1.msra.mxu0 0.0
    %354 = vmatprep.subr.mxu0 0.0
    %355 = vmatpush1.msra.mxu0 0.0
    %356 = vmatprep.subr.mxu0 0.0
    %357 = vmatpush1.msra.mxu0 0.0
    %358 = vmatprep.subr.mxu0 0.0
    %359 = vmatpush1.msra.mxu0 0.0
    %360 = vmatprep.subr.mxu0 0.0
    %361 = vmatpush1.msra.mxu0 0.0
    %362 = vmatprep.subr.mxu0 0.0
    %363 = vmatpush1.msra.mxu0 0.0
    %364 = vmatprep.subr.mxu0 0.0
    %365 = vmatpush1.msra.mxu0 0.0
    %366 = vmatprep.mubr.f32.mxu0 0.0
    %367 = vmatmul.mubr.f32.gmra.mrb[0].mxu0 %v300
    %v368 = vpop.f32.mrb[0].mxu0
    %v369 = vadd.f32 %v296, %v368
    %v370 = vpop.f32.mrb[0].mxu0
    %371 = vdwg.mxu0
    %s372 = scalar_lea.vmem [#allocation2], 2
    %v373 = vld [vmem:[%s372] ss:$4 sm:$0x3]
    %v374 = vld [vmem:[#allocation4 + $0x10] sm:$0xff]
    %v376 = vsel %vm219, %v373, 0
    %378 = vmatprep.subr.mxu0 0.0
    %379 = vmatpush1.msra.mxu0 %v374
    %380 = vmatprep.subr.mxu0 0.0
    %381 = vmatpush1.msra.mxu0 0.0
    %382 = vmatprep.subr.mxu0 0.0
    %383 = vmatpush1.msra.mxu0 0.0
    %384 = vmatprep.subr.mxu0 0.0
    %385 = vmatpush1.msra.mxu0 0.0
    %386 = vmatprep.subr.mxu0 0.0
    %387 = vmatpush1.msra.mxu0 0.0
    %388 = vmatprep.subr.mxu0 0.0
    %389 = vmatpush1.msra.mxu0 0.0
    %390 = vmatprep.subr.mxu0 0.0
    %391 = vmatpush1.msra.mxu0 0.0
    %392 = vmatprep.subr.mxu0 0.0
    %393 = vmatpush1.msra.mxu0 0.0
    %394 = vmatprep.subr.mxu0 0.0
    %395 = vmatpush1.msra.mxu0 0.0
    %396 = vmatprep.subr.mxu0 0.0
    %397 = vmatpush1.msra.mxu0 0.0
    %398 = vmatprep.subr.mxu0 0.0
    %399 = vmatpush1.msra.mxu0 0.0
    %400 = vmatprep.subr.mxu0 0.0
    %401 = vmatpush1.msra.mxu0 0.0
    %402 = vmatprep.subr.mxu0 0.0
    %403 = vmatpush1.msra.mxu0 0.0
    %404 = vmatprep.subr.mxu0 0.0
    %405 = vmatpush1.msra.mxu0 0.0
    %406 = vmatprep.subr.mxu0 0.0
    %407 = vmatpush1.msra.mxu0 0.0
    %408 = vmatprep.subr.mxu0 0.0
    %409 = vmatpush1.msra.mxu0 0.0
    %410 = vmatprep.subr.mxu0 0.0
    %411 = vmatpush1.msra.mxu0 0.0
    %412 = vmatprep.subr.mxu0 0.0
    %413 = vmatpush1.msra.mxu0 0.0
    %414 = vmatprep.subr.mxu0 0.0
    %415 = vmatpush1.msra.mxu0 0.0
    %416 = vmatprep.subr.mxu0 0.0
    %417 = vmatpush1.msra.mxu0 0.0
    %418 = vmatprep.subr.mxu0 0.0
    %419 = vmatpush1.msra.mxu0 0.0
    %420 = vmatprep.subr.mxu0 0.0
    %421 = vmatpush1.msra.mxu0 0.0
    %422 = vmatprep.subr.mxu0 0.0
    %423 = vmatpush1.msra.mxu0 0.0
    %424 = vmatprep.subr.mxu0 0.0
    %425 = vmatpush1.msra.mxu0 0.0
    %426 = vmatprep.subr.mxu0 0.0
    %427 = vmatpush1.msra.mxu0 0.0
    %428 = vmatprep.subr.mxu0 0.0
    %429 = vmatpush1.msra.mxu0 0.0
    %430 = vmatprep.subr.mxu0 0.0
    %431 = vmatpush1.msra.mxu0 0.0
    %432 = vmatprep.subr.mxu0 0.0
    %433 = vmatpush1.msra.mxu0 0.0
    %434 = vmatprep.subr.mxu0 0.0
    %435 = vmatpush1.msra.mxu0 0.0
    %436 = vmatprep.subr.mxu0 0.0
    %437 = vmatpush1.msra.mxu0 0.0
    %438 = vmatprep.subr.mxu0 0.0
    %439 = vmatpush1.msra.mxu0 0.0
    %440 = vmatprep.subr.mxu0 0.0
    %441 = vmatpush1.msra.mxu0 0.0
    %442 = vmatprep.mubr.f32.mxu0 0.0
    %443 = vmatmul.mubr.f32.gmra.mrb[0].mxu0 %v376
    %v444 = vpop.f32.mrb[0].mxu0
    %v445 = vadd.f32 0.0, %v444
    %v446 = vpop.f32.mrb[0].mxu0
    %447 = vdwg.mxu0
    %v448 = vadd.f32 %v369, %v445
    %s449 = scalar_lea.vmem [#allocation2], 3
    %v450 = vld [vmem:[%s449] ss:$4 sm:$0x3]
    %v451 = vld [vmem:[#allocation4 + $0x18] sm:$0xff]
    %v453 = vsel %vm219, %v450, 0
    %455 = vmatprep.subr.mxu0 0.0
    %456 = vmatpush1.msra.mxu0 %v451
    %457 = vmatprep.subr.mxu0 0.0
    %458 = vmatpush1.msra.mxu0 0.0
    %459 = vmatprep.subr.mxu0 0.0
    %460 = vmatpush1.msra.mxu0 0.0
    %461 = vmatprep.subr.mxu0 0.0
    %462 = vmatpush1.msra.mxu0 0.0
    %463 = vmatprep.subr.mxu0 0.0
    %464 = vmatpush1.msra.mxu0 0.0
    %465 = vmatprep.subr.mxu0 0.0
    %466 = vmatpush1.msra.mxu0 0.0
    %467 = vmatprep.subr.mxu0 0.0
    %468 = vmatpush1.msra.mxu0 0.0
    %469 = vmatprep.subr.mxu0 0.0
    %470 = vmatpush1.msra.mxu0 0.0
    %471 = vmatprep.subr.mxu0 0.0
    %472 = vmatpush1.msra.mxu0 0.0
    %473 = vmatprep.subr.mxu0 0.0
    %474 = vmatpush1.msra.mxu0 0.0
    %475 = vmatprep.subr.mxu0 0.0
    %476 = vmatpush1.msra.mxu0 0.0
    %477 = vmatprep.subr.mxu0 0.0
    %478 = vmatpush1.msra.mxu0 0.0
    %479 = vmatprep.subr.mxu0 0.0
    %480 = vmatpush1.msra.mxu0 0.0
    %481 = vmatprep.subr.mxu0 0.0
    %482 = vmatpush1.msra.mxu0 0.0
    %483 = vmatprep.subr.mxu0 0.0
    %484 = vmatpush1.msra.mxu0 0.0
    %485 = vmatprep.subr.mxu0 0.0
    %486 = vmatpush1.msra.mxu0 0.0
    %487 = vmatprep.subr.mxu0 0.0
    %488 = vmatpush1.msra.mxu0 0.0
    %489 = vmatprep.subr.mxu0 0.0
    %490 = vmatpush1.msra.mxu0 0.0
    %491 = vmatprep.subr.mxu0 0.0
    %492 = vmatpush1.msra.mxu0 0.0
    %493 = vmatprep.subr.mxu0 0.0
    %494 = vmatpush1.msra.mxu0 0.0
    %495 = vmatprep.subr.mxu0 0.0
    %496 = vmatpush1.msra.mxu0 0.0
    %497 = vmatprep.subr.mxu0 0.0
    %498 = vmatpush1.msra.mxu0 0.0
    %499 = vmatprep.subr.mxu0 0.0
    %500 = vmatpush1.msra.mxu0 0.0
    %501 = vmatprep.subr.mxu0 0.0
    %502 = vmatpush1.msra.mxu0 0.0
    %503 = vmatprep.subr.mxu0 0.0
    %504 = vmatpush1.msra.mxu0 0.0
    %505 = vmatprep.subr.mxu0 0.0
    %506 = vmatpush1.msra.mxu0 0.0
    %507 = vmatprep.subr.mxu0 0.0
    %508 = vmatpush1.msra.mxu0 0.0
    %509 = vmatprep.subr.mxu0 0.0
    %510 = vmatpush1.msra.mxu0 0.0
    %511 = vmatprep.subr.mxu0 0.0
    %512 = vmatpush1.msra.mxu0 0.0
    %513 = vmatprep.subr.mxu0 0.0
    %514 = vmatpush1.msra.mxu0 0.0
    %515 = vmatprep.subr.mxu0 0.0
    %516 = vmatpush1.msra.mxu0 0.0
    %517 = vmatprep.subr.mxu0 0.0
    %518 = vmatpush1.msra.mxu0 0.0
    %519 = vmatprep.mubr.f32.mxu0 0.0
    %520 = vmatmul.mubr.f32.gmra.mrb[0].mxu0 %v453
    %v521 = vpop.f32.mrb[0].mxu0
    %v522 = vadd.f32 0.0, %v521
    %v523 = vpop.f32.mrb[0].mxu0
    %524 = vdwg.mxu0
    %v525 = vadd.f32 %v448, %v522
    %v526 = vld [vmem:[%s6] sm:$0x1]
    %v528 = vlaneseq
    %v529 = vshrl.u32 %v528, 7
    %v530 = vsub.s32 0, %v529
    %v531 = vrot.slane %v526, %v530
    %v533 = vadd.f32 %v525, %v531
    %v534 = vmax.f32 %v533, 0.0
    %v535 = vld [vmem:[%s7] sm:$0x1]
    %v537 = vlaneseq
    %v538 = vshrl.u32 %v537, 7
    %v539 = vsub.s32 0, %v538
    %v540 = vrot.slane %v535, %v539
    %v542 = vmul.f32 %v534, %v540
    %vm543 = vcmask 254976
    %v544 = vsel %vm543, %v542, 0.0
    %545 = vadd.xlane.f32.xlu0 %v544
    %v546 = vpop.xlane.xlu0 %545
    %s547 = sld [smem:[#allocation3]]
    %v548 = vstv %s547
    %v549 = vadd.f32 %v546, %v548
    %vm550 = vcmask 1024
    %551 = vst.msk [vmem:[%s9] sm:$0x3] %vm550, %v549
    // Predicated region
    $region42: #{tpu_custom_call.1} parent=1 // pred_check
      _
    $region43: #{tpu_custom_call.1} parent=1 // pred_check_branch
      %553 = sbr.rel (0) target = $region45
    $region44: #{tpu_custom_call.1} parent=1 // pred_region
      _
    $region45: #{tpu_custom_call.1} parent=1 // pred_fallthru
      _
    // Predicated region
    $region46: #{tpu_custom_call.1} parent=1 // pred_check
      _
    $region47: #{tpu_custom_call.1} parent=1 // pred_check_branch
      %555 = sbr.rel (0) target = $region49
    $region48: #{tpu_custom_call.1} parent=1 // pred_region
      _
    $region49: #{tpu_custom_call.1} parent=1 // pred_fallthru
      _
    %556 = vsyncpa [#allocation5], 1

</llo_original>
